<compile_context>
chip_gen: v5e
topology: v5e:2x2
jax: 0.10.0
libtpu: 0.0.40
codegen_flags: <defaults>
</compile_context>

<pallas_src>
import functools
import math

import jax
import jax.numpy as jnp
from jax.experimental import pallas as pl
from jax.experimental.pallas import tpu as pltpu


def _locked_dropout_kernel(mask_ref, x_ref, o_ref):
    # mask_ref: (1, W) f32, pre-scaled (0 or 1/(1-p)), resident across the grid.
    # x_ref / o_ref: (tile_rows, W) tile of the input / output.
    x = x_ref[...].astype(jnp.float32)
    o_ref[...] = (x * mask_ref[...]).astype(o_ref.dtype)


def _lane_dense_layout(T, C):
    """Pick a 2-D layout (rows, width, repeats) with a lane-dense width.

    width is a multiple of 128 whenever possible; `repeats` = width // C is
    how many times the (1, C) mask must be tiled along lanes.
    """
    if C % 128 == 0:
        return T, C, 1
    L = math.lcm(C, 128)
    total = T * C
    if total % L == 0:
        return total // L, L, L // C
    # Fallback: keep (T, C); last-dim block equals the full array dim, so it
    # is legal (but stores are masked). Only hit for awkward shapes.
    return T, C, 1


def _choose_tile_rows(R, W, itemsize, target_bytes=8 * 1024 * 1024):
    """Row-tile: ~target_bytes per tile, dtype-sublane-aligned, >=2 grid steps."""
    m = max(8, 32 // max(1, itemsize))  # 8 for f32, 16 for bf16, 32 for int8/fp8
    rows = (target_bytes // max(1, W * itemsize)) // m * m
    rows = max(m, rows)
    # Prefer at least 2 grid steps so the "parallel" axis can use both of
    # v7x's TensorCores (no-op cost on single-TC v5e/v6e).
    if R >= 2 * m:
        half = -(-R // 2)                       # ceil(R / 2)
        half = -(-half // m) * m                # round up to sublane multiple
        rows = min(rows, half)
    if rows >= R:
        return R
    return rows


def locked_dropout(x, *, dropout, seed, training=True, donate=False):
    """LockedDropout forward.  x: (T, B, H) = (seq_len, batch, hidden)."""
    if (not training) or (not dropout):
        return x

    T, B, H = x.shape
    C = B * H
    keep_prob = 1.0 - float(dropout)

    # Single Bernoulli mask over (1, B*H), pre-scaled by 1/(1-p), kept in f32.
    key = jax.random.PRNGKey(seed)
    keep = jax.random.bernoulli(key, p=keep_prob, shape=(1, C))
    mask = keep.astype(jnp.float32) * jnp.float32(1.0 / keep_prob)

    # Lane-dense repack of (T, C) -> (R, W) with W % 128 == 0 when possible.
    R, W, repeats = _lane_dense_layout(T, C)
    if repeats > 1:
        mask = jnp.tile(mask, (1, repeats))
    x2d = x.reshape(R, W)

    itemsize = x2d.dtype.itemsize
    tile_rows = _choose_tile_rows(R, W, itemsize)
    grid = (pl.cdiv(R, tile_rows),)

    cost = pl.CostEstimate(
        flops=T * C,
        transcendentals=0,
        bytes_accessed=2 * T * C * itemsize + W * 4,
    )

    kwargs = {}
    if donate:
        # output 0 reuses x2d's HBM buffer (caller must be able to donate x).
        kwargs["input_output_aliases"] = {1: 0}

    y2d = pl.pallas_call(
        _locked_dropout_kernel,
        out_shape=jax.ShapeDtypeStruct((R, W), x.dtype),
        grid=grid,
        in_specs=[
            pl.BlockSpec((1, W), lambda t: (0, 0)),           # mask: resident block
            pl.BlockSpec((tile_rows, W), lambda t: (t, 0)),   # x tile
        ],
        out_specs=pl.BlockSpec((tile_rows, W), lambda t: (t, 0)),
        compiler_params=pltpu.CompilerParams(
            dimension_semantics=("parallel",),
            vmem_limit_bytes=48 * 1024 * 1024,
        ),
        cost_estimate=cost,
        **kwargs,
    )(mask, x2d)

    return y2d.reshape(T, B, H)


def _reference(x, dropout, seed):
    """Pure-JAX reference with the identical mask draw."""
    T, B, H = x.shape
    keep_prob = 1.0 - float(dropout)
    keep = jax.random.bernoulli(jax.random.PRNGKey(seed), p=keep_prob,
                                shape=(1, B * H))
    mask = keep.astype(jnp.float32) * jnp.float32(1.0 / keep_prob)
    y = x.astype(jnp.float32) * mask.reshape(1, B, H)
    return y.astype(x.dtype)


if __name__ == "__main__":
    dropout = 0.5
    seed = 1234
    scale = 1.0 / (1.0 - dropout)
    key = jax.random.PRNGKey(0)

    # --- case 1: small shape from the module, C=64 -> lane-dense repack path ---
    T, B, H = 8, 2, 32
    x = jax.random.normal(key, (T, B, H), dtype=jnp.float32)
    y = jax.block_until_ready(locked_dropout(x, dropout=dropout, seed=seed))
    y_ref = _reference(x, dropout, seed)
    assert bool(jnp.allclose(y, y_ref, atol=1e-6)), "case1: kernel != reference"

    # Locked-over-time + value-set checks (only where x is safely nonzero).
    ok = jnp.abs(x) > 1e-6
    ratio = jnp.where(ok, y / jnp.where(ok, x, 1.0), 0.0)
    same_over_t = jnp.where(ok, jnp.abs(ratio - ratio[0:1]), 0.0)
    assert bool(jnp.all(same_over_t < 1e-5)), "mask not locked over time"
    is_zero = jnp.abs(ratio) < 1e-5
    is_scale = jnp.abs(ratio - scale) < 1e-5
    assert bool(jnp.all((~ok) | is_zero | is_scale)), "mask values not in {0, 1/(1-p)}"

    # --- case 2: C multiple of 128, grid has >= 2 steps ---
    T2, B2, H2 = 64, 4, 96   # C = 384
    x2 = jax.random.normal(jax.random.fold_in(key, 1), (T2, B2, H2), jnp.float32)
    y2 = jax.block_until_ready(locked_dropout(x2, dropout=dropout, seed=seed + 1))
    assert bool(jnp.allclose(y2, _reference(x2, dropout, seed + 1), atol=1e-6)), \
        "case2: kernel != reference"

    # --- case 3: bf16 input, non-128 C, lane-dense repack ---
    T3, B3, H3 = 32, 2, 40   # C = 80
    x3 = jax.random.normal(jax.random.fold_in(key, 2), (T3, B3, H3),
                           jnp.float32).astype(jnp.bfloat16)
    y3 = jax.block_until_ready(locked_dropout(x3, dropout=dropout, seed=seed + 2))
    assert bool(jnp.allclose(y3.astype(jnp.float32),
                             _reference(x3, dropout, seed + 2).astype(jnp.float32),
                             atol=1e-2, rtol=1e-2)), "case3: kernel != reference"

    # Eval / no-dropout path is identity.
    y_eval = locked_dropout(x, dropout=dropout, seed=seed, training=False)
    assert bool(jnp.all(y_eval == x))
    y_nodrop = locked_dropout(x, dropout=0.0, seed=seed, training=True)
    assert bool(jnp.all(y_nodrop == x))

    print("KERNEL_OK")
</pallas_src>

<mosaic_0001>
module attributes {stable_mosaic.version = 11 : i64} {
  func.func @_locked_dropout_kernel(%arg0: i32, %arg1: memref<1x128xf32, #tpu.memory_space<vmem>>, %arg2: memref<4x128xf32, #tpu.memory_space<vmem>>, %arg3: memref<4x128xf32, #tpu.memory_space<vmem>>) attributes {dimension_semantics = [#tpu.dimension_semantics<parallel>], iteration_bounds = array<i64: 1>, scalar_prefetch = 0 : i64, scratch_operands = 0 : i64, tpu.core_type = #tpu.core_type<tc>, window_params = [{pipeline_mode = #tpu.pipeline_mode<synchronous>, transform_indices = @transform_0, window_bounds = array<i64: 1, 128>}, {transform_indices = @transform_1, window_bounds = array<i64: 4, 128>}, {transform_indices = @transform_2, window_bounds = array<i64: 4, 128>}]} {
    %c0 = arith.constant 0 : index
    %c0_0 = arith.constant 0 : index
    %0 = vector.load %arg2[%c0, %c0_0] : memref<4x128xf32, #tpu.memory_space<vmem>>, vector<4x128xf32>
    %c0_1 = arith.constant 0 : index
    %c0_2 = arith.constant 0 : index
    %1 = vector.load %arg1[%c0_1, %c0_2] : memref<1x128xf32, #tpu.memory_space<vmem>>, vector<1x128xf32>
    %2 = vector.broadcast %1 : vector<1x128xf32> to vector<4x128xf32>
    %3 = arith.mulf %0, %2 : vector<4x128xf32>
    %c0_3 = arith.constant 0 : index
    %c0_4 = arith.constant 0 : index
    %4 = vector.load %arg3[%c0_3, %c0_4] : memref<4x128xf32, #tpu.memory_space<vmem>>, vector<4x128xf32>
    tpu.vector_store %arg3[%c0_3, %c0_4], %3 {strides = array<i32>} : memref<4x128xf32, #tpu.memory_space<vmem>>, vector<4x128xf32>,
    return
  }
  func.func @transform_0(%arg0: i32) -> (i32, i32) {
    %c0_i32 = arith.constant 0 : i32
    %c0_i32_0 = arith.constant 0 : i32
    %c0_i32_1 = arith.constant 0 : i32
    return %c0_i32, %c0_i32_0 : i32, i32
  }
  func.func @transform_1(%arg0: i32) -> (i32, i32) {
    %c0_i32 = arith.constant 0 : i32
    %c0_i32_0 = arith.constant 0 : i32
    return %arg0, %c0_i32 : i32, i32
  }
  func.func @transform_2(%arg0: i32) -> (i32, i32) {
    %c0_i32 = arith.constant 0 : i32
    %c0_i32_0 = arith.constant 0 : i32
    return %arg0, %c0_i32 : i32, i32
  }
}

</mosaic_0001>

<llo_original>
// kernel: tpu_custom_call.1
$region0: #{tpu_custom_call.1}
  #allocation0 [shape = 'u32[]', space=smem, size = 0x4, offset = 0x4, fixed_abs, tag = 'smem constant byte address 0x4 - core index']
  #allocation1 [shape = 'u32[72,128]{1,0:T(1,128)}', space=vmem, size = 0x9000, scoped, tag = 'internal scratch']
  %s0 = inlined_call_operand.hbm [shape: f32[1,128], index: 0, kind: input, shape index: {}]
  %s1 = inlined_call_operand.hbm [shape: f32[4,128], index: 1, kind: input, shape index: {}]
  %s2 = inlined_call_operand.hbm [shape: f32[4,128], index: 2, kind: output, shape index: {}]
  %s3 = sld [smem:[#allocation0]]
  $region26: #{tpu_custom_call.1} parent=0
    _
  %s5 = ssub.s32 1, %s3
  %s6 = scalar_select 0, %s5, %s3
  $region1: #{tpu_custom_call.1} parent=0
    #allocation2 [shape = 'u8[512]{0}', space=vmem, size = 0x400, scoped, tag = 'input window, operand 0, single buffered']
    #allocation3 [shape = 's32[1]{0}', space=sflag, size = 0x4, scoped, tag = 'scoped memory for tpu_custom_call.1']
    #allocation4 [shape = 's32[1]{0}', space=sflag, size = 0x4, scoped, tag = 'scoped memory for tpu_custom_call.1']
    #allocation5 [shape = 'u8[2048]{0}', space=vmem, size = 0x800, scoped, tag = 'input window, operand 1, single buffered']
    #allocation6 [shape = 's32[1]{0}', space=sflag, size = 0x4, scoped, tag = 'scoped memory for tpu_custom_call.1']
    #allocation7 [shape = 'u8[2048]{0}', space=vmem, size = 0x800, scoped, tag = 'output window, operand 0, single buffered']
    %7 = vsyncpa [#allocation3], 0
    %8 = vsyncpa [#allocation6], 0
    %9 = vsyncpa [#allocation4], 0
    // Predicated region
    $region2: #{tpu_custom_call.1} parent=1 // pred_check
      _
    $region3: #{tpu_custom_call.1} parent=1 // pred_check_branch
      %11 = sbr.rel (0) target = $region5
    $region4: #{tpu_custom_call.1} parent=1 // pred_region
      %13 = vsyncadd [#allocation3], 0
      %s15 = sshll.u32 %s0, 4
      %s16 = int_to_ptr.hbm [resolvable:$true] %s15
      %s17 = sshll.u32 [#allocation2], 4
      %s18 = int_to_ptr.vmem [resolvable:$true] %s17
      %20 = dma.hbm_to_vmem [thread:$0]  %s16, 16, %s18, [#allocation3]
    $region5: #{tpu_custom_call.1} parent=1 // pred_fallthru
      _
    // Predicated region
    $region6: #{tpu_custom_call.1} parent=1 // pred_check
      _
    $region7: #{tpu_custom_call.1} parent=1 // pred_check_branch
      %22 = sbr.rel (0) target = $region9
    $region8: #{tpu_custom_call.1} parent=1 // pred_region
      %24 = vsyncadd [#allocation6], 0
      %s26 = sshll.u32 %s1, 4
      %s27 = int_to_ptr.hbm [resolvable:$true] %s26
      %s28 = sshll.u32 [#allocation5], 4
      %s29 = int_to_ptr.vmem [resolvable:$true] %s28
      %31 = dma.hbm_to_vmem [thread:$0]  %s27, 64, %s29, [#allocation6]
    $region9: #{tpu_custom_call.1} parent=1 // pred_fallthru
      _
    // Predicated region
    $region10: #{tpu_custom_call.1} parent=1 // pred_check
      _
    $region11: #{tpu_custom_call.1} parent=1 // pred_check_branch
      %33 = sbr.rel (0) target = $region13
    $region12: #{tpu_custom_call.1} parent=1 // pred_region
      %35 = dma.done [#allocation3], 16
    $region13: #{tpu_custom_call.1} parent=1 // pred_fallthru
      _
    // Predicated region
    $region14: #{tpu_custom_call.1} parent=1 // pred_check
      _
    $region15: #{tpu_custom_call.1} parent=1 // pred_check_branch
      %37 = sbr.rel (0) target = $region17
    $region16: #{tpu_custom_call.1} parent=1 // pred_region
      %39 = dma.done [#allocation6], 64
    $region17: #{tpu_custom_call.1} parent=1 // pred_fallthru
      _
    %v40 = vld [vmem:[#allocation5] sm:$0xf]
    %v41 = vld [vmem:[#allocation2] sm:$0x1]
    %v43 = vperm.slane %v41, 0
    %v45 = vmul.f32 %v40, %v43
    %46 = vst [vmem:[#allocation7] sm:$0xf] %v45
    // Predicated region
    $region18: #{tpu_custom_call.1} parent=1 // pred_check
      _
    $region19: #{tpu_custom_call.1} parent=1 // pred_check_branch
      %48 = sbr.rel (0) target = $region21
    $region20: #{tpu_custom_call.1} parent=1 // pred_region
      %50 = vsyncadd [#allocation4], 0
      %s52 = sshll.u32 [#allocation7], 4
      %s53 = int_to_ptr.vmem [resolvable:$true] %s52
      %s54 = sshll.u32 %s2, 4
      %s55 = int_to_ptr.hbm [resolvable:$true] %s54
      %57 = dma.vmem_to_hbm [thread:$0]  %s53, 64, %s55, [#allocation4]
    $region21: #{tpu_custom_call.1} parent=1 // pred_fallthru
      _
    // Predicated region
    $region22: #{tpu_custom_call.1} parent=1 // pred_check
      _
    $region23: #{tpu_custom_call.1} parent=1 // pred_check_branch
      %59 = sbr.rel (0) target = $region25
    $region24: #{tpu_custom_call.1} parent=1 // pred_region
      %61 = dma.done [#allocation4], 64
    $region25: #{tpu_custom_call.1} parent=1 // pred_fallthru
      _
    %62 = vsyncpa [#allocation3], 1
    %63 = vsyncpa [#allocation6], 1
    %64 = vsyncpa [#allocation4], 1

</llo_original>
